<compile_context>
chip_gen: v7x
topology: tpu7x:2x2x1
jax: 0.10.0
libtpu: 0.0.40
codegen_flags: <defaults>
</compile_context>

<pallas_src>
import math

import jax
import jax.numpy as jnp
from jax.experimental import pallas as pl
from jax.experimental.pallas import tpu as pltpu


def _round_up(x, m):
    return (x + m - 1) // m * m


def _head_kernel(x_ref, w1_ref, b1_ref, w2_ref, b2_ref, o_ref):
    # ff_1: x @ W1 on the MXU (f32 accumulate); bias add + tanh in f32.
    h = jnp.dot(x_ref[...], w1_ref[...], preferred_element_type=jnp.float32)
    h = jnp.tanh(h + b1_ref[...])
    # ff_2: tanh(h) @ W2 + b2; feed MXU in the weight dtype, accumulate in f32.
    out = jnp.dot(h.astype(w2_ref.dtype), w2_ref[...],
                  preferred_element_type=jnp.float32)
    o_ref[...] = (out + b2_ref[...]).astype(o_ref.dtype)


def _pick_tile_b(batch, dim_in, dim_ff, nc_pad, in_itemsize, w_itemsize,
                 budget_bytes=24 * 1024 * 1024):
    """Largest batch tile (multiple of 8) whose working set fits the VMEM budget."""
    cap = max(8, _round_up(batch, 8))
    for tile in (512, 256, 128, 64, 32, 16, 8):
        if tile > cap:
            continue
        need = (2 * tile * dim_in * in_itemsize                        # x (double-buffered)
                + 2 * (dim_in * dim_ff + dim_ff * nc_pad) * w_itemsize  # resident weights
                + 2 * (dim_ff + nc_pad) * 4                             # biases (f32)
                + 2 * tile * nc_pad * 4                                 # out (double-buffered)
                + tile * dim_ff * 4)                                    # f32 intermediate h
        if need <= budget_bytes:
            return tile
    return 8


def classification_head(x, w1, b1, w2, b2, *, mxu_dtype=jnp.bfloat16,
                        tile_b=None):
    """Fused forward of ClassificationHead: tanh(x @ w1 + b1) @ w2 + b2.

    x:  [B, dim_in]
    w1: [dim_in, dim_ff]      (== PyTorch ff_1.weight.T)
    b1: [dim_ff] or [1, dim_ff]
    w2: [dim_ff, num_cls]     (== PyTorch ff_2.weight.T)
    b2: [num_cls] or [1, num_cls]
    returns: [B, num_cls] in x.dtype
    """
    out_dtype = x.dtype
    B, dim_in = x.shape
    dim_ff = w1.shape[1]
    num_classes = w2.shape[1]

    # Biases stay 2D and f32 (cheap; v5e VPU/EUP have no bf16 anyway).
    b1 = b1.reshape(1, dim_ff).astype(jnp.float32)
    b2 = b2.reshape(1, num_classes).astype(jnp.float32)

    # Lane-dense output: pad the class dim up to a multiple of 128.
    nc_pad = _round_up(num_classes, 128)
    if nc_pad != num_classes:
        w2 = jnp.pad(w2, ((0, 0), (0, nc_pad - num_classes)))
        b2 = jnp.pad(b2, ((0, 0), (0, nc_pad - num_classes)))

    # Narrow MXU operands (f32 accumulation is requested inside the kernel).
    x_mxu = x.astype(mxu_dtype)
    w1 = w1.astype(mxu_dtype)
    w2 = w2.astype(mxu_dtype)
    in_itemsize = jnp.dtype(mxu_dtype).itemsize

    if tile_b is None:
        tile_b = _pick_tile_b(B, dim_in, dim_ff, nc_pad, in_itemsize, in_itemsize)

    b_pad = _round_up(B, tile_b)
    if b_pad != B:
        x_mxu = jnp.pad(x_mxu, ((0, b_pad - B), (0, 0)))

    grid = (b_pad // tile_b,)
    flops = 2 * B * dim_in * dim_ff + 2 * B * dim_ff * num_classes
    bytes_accessed = (B * dim_in * in_itemsize
                      + dim_in * dim_ff * in_itemsize
                      + dim_ff * nc_pad * in_itemsize
                      + (dim_ff + nc_pad) * 4
                      + B * num_classes * jnp.dtype(out_dtype).itemsize)

    out = pl.pallas_call(
        _head_kernel,
        out_shape=jax.ShapeDtypeStruct((b_pad, nc_pad), out_dtype),
        grid=grid,
        in_specs=[
            pl.BlockSpec((tile_b, dim_in), lambda i: (i, 0)),   # x: pipelined tiles
            pl.BlockSpec((dim_in, dim_ff), lambda i: (0, 0)),   # w1: VMEM-resident
            pl.BlockSpec((1, dim_ff), lambda i: (0, 0)),        # b1: VMEM-resident
            pl.BlockSpec((dim_ff, nc_pad), lambda i: (0, 0)),   # w2: VMEM-resident
            pl.BlockSpec((1, nc_pad), lambda i: (0, 0)),        # b2: VMEM-resident
        ],
        out_specs=pl.BlockSpec((tile_b, nc_pad), lambda i: (i, 0)),
        compiler_params=pltpu.CompilerParams(
            dimension_semantics=("parallel",)),
        cost_estimate=pl.CostEstimate(
            flops=flops,
            transcendentals=B * dim_ff,
            bytes_accessed=bytes_accessed),
    )(x_mxu, w1, b1, w2, b2)

    # Strip batch / class padding.
    return out[:B, :num_classes]


def _init_params(key, dim_in, dim_ff, num_classes, dtype=jnp.float32):
    """Deterministic init mimicking nn.Linear's kaiming-uniform defaults."""
    k1, k2, k3, k4 = jax.random.split(key, 4)
    bound1 = 1.0 / math.sqrt(dim_in)
    bound2 = 1.0 / math.sqrt(dim_ff)
    # Stored already transposed relative to PyTorch's [out_features, in_features].
    w1 = jax.random.uniform(k1, (dim_in, dim_ff), dtype, -bound1, bound1)
    b1 = jax.random.uniform(k2, (1, dim_ff), dtype, -bound1, bound1)
    w2 = jax.random.uniform(k3, (dim_ff, num_classes), dtype, -bound2, bound2)
    b2 = jax.random.uniform(k4, (1, num_classes), dtype, -bound2, bound2)
    return w1, b1, w2, b2


if __name__ == "__main__":
    key = jax.random.PRNGKey(0)
    batch, dim_in, dim_ff, num_classes = 8, 32, 64, 16

    kx, kp = jax.random.split(key)
    x = jax.random.normal(kx, (batch, dim_in), jnp.float32)
    w1, b1, w2, b2 = _init_params(kp, dim_in, dim_ff, num_classes)

    out = classification_head(x, w1, b1, w2, b2)
    out = jax.block_until_ready(out)
    assert out.shape == (batch, num_classes)

    # Reference (a): same bf16-operand / f32-accumulate math as the kernel.
    mxu = jnp.bfloat16
    h_ref = jnp.tanh(jnp.dot(x.astype(mxu), w1.astype(mxu),
                             preferred_element_type=jnp.float32) + b1)
    ref_mxu = jnp.dot(h_ref.astype(mxu), w2.astype(mxu),
                      preferred_element_type=jnp.float32) + b2
    # Reference (b): full-f32 math (PyTorch semantics); loose tol covers bf16 MXU rounding.
    ref_f32 = jnp.tanh(x @ w1 + b1) @ w2 + b2

    assert jnp.allclose(out, ref_mxu, atol=1e-3, rtol=1e-2), \
        float(jnp.max(jnp.abs(out - ref_mxu)))
    assert jnp.allclose(out, ref_f32, atol=5e-2, rtol=5e-2), \
        float(jnp.max(jnp.abs(out - ref_f32)))

    print("KERNEL_OK")
</pallas_src>

<mosaic_0001>
module attributes {stable_mosaic.version = 11 : i64} {
  func.func @_head_kernel(%arg0: i32, %arg1: memref<8x32xbf16, #tpu.memory_space<vmem>>, %arg2: memref<32x64xbf16, #tpu.memory_space<vmem>>, %arg3: memref<1x64xf32, #tpu.memory_space<vmem>>, %arg4: memref<64x128xbf16, #tpu.memory_space<vmem>>, %arg5: memref<1x128xf32, #tpu.memory_space<vmem>>, %arg6: memref<8x128xf32, #tpu.memory_space<vmem>>) attributes {dimension_semantics = [#tpu.dimension_semantics<parallel>], iteration_bounds = array<i64: 1>, scalar_prefetch = 0 : i64, scratch_operands = 0 : i64, tpu.core_type = #tpu.core_type<tc>, window_params = [{transform_indices = @transform_0, window_bounds = array<i64: 8, 32>}, {pipeline_mode = #tpu.pipeline_mode<synchronous>, transform_indices = @transform_1, window_bounds = array<i64: 32, 64>}, {pipeline_mode = #tpu.pipeline_mode<synchronous>, transform_indices = @transform_2, window_bounds = array<i64: 1, 64>}, {pipeline_mode = #tpu.pipeline_mode<synchronous>, transform_indices = @transform_3, window_bounds = array<i64: 64, 128>}, {pipeline_mode = #tpu.pipeline_mode<synchronous>, transform_indices = @transform_4, window_bounds = array<i64: 1, 128>}, {transform_indices = @transform_5, window_bounds = array<i64: 8, 128>}]} {
    %c0 = arith.constant 0 : index
    %c0_0 = arith.constant 0 : index
    %0 = vector.load %arg1[%c0, %c0_0] : memref<8x32xbf16, #tpu.memory_space<vmem>>, vector<8x32xbf16>
    %c0_1 = arith.constant 0 : index
    %c0_2 = arith.constant 0 : index
    %1 = vector.load %arg2[%c0_1, %c0_2] : memref<32x64xbf16, #tpu.memory_space<vmem>>, vector<32x64xbf16>
    %cst = arith.constant dense<0.000000e+00> : vector<8x64xf32>
    %2 = tpu.matmul %0, %1, %cst {dimension_numbers = #tpu.dot_dimension_numbers<[1], [0], [0], [1], [0, 0, 1, 1], [], []>} : vector<8x32xbf16>, vector<32x64xbf16>, vector<8x64xf32> -> vector<8x64xf32>
    %c0_3 = arith.constant 0 : index
    %c0_4 = arith.constant 0 : index
    %3 = vector.load %arg3[%c0_3, %c0_4] : memref<1x64xf32, #tpu.memory_space<vmem>>, vector<1x64xf32>
    %4 = vector.broadcast %3 : vector<1x64xf32> to vector<8x64xf32>
    %5 = arith.addf %2, %4 : vector<8x64xf32>
    %6 = math.tanh %5 : vector<8x64xf32>
    %7 = arith.truncf %6 : vector<8x64xf32> to vector<8x64xbf16>
    %c0_5 = arith.constant 0 : index
    %c0_6 = arith.constant 0 : index
    %8 = vector.load %arg4[%c0_5, %c0_6] : memref<64x128xbf16, #tpu.memory_space<vmem>>, vector<64x128xbf16>
    %cst_7 = arith.constant dense<0.000000e+00> : vector<8x128xf32>
    %9 = tpu.matmul %7, %8, %cst_7 {dimension_numbers = #tpu.dot_dimension_numbers<[1], [0], [0], [1], [0, 0, 1, 1], [], []>} : vector<8x64xbf16>, vector<64x128xbf16>, vector<8x128xf32> -> vector<8x128xf32>
    %c0_8 = arith.constant 0 : index
    %c0_9 = arith.constant 0 : index
    %10 = vector.load %arg5[%c0_8, %c0_9] : memref<1x128xf32, #tpu.memory_space<vmem>>, vector<1x128xf32>
    %11 = vector.broadcast %10 : vector<1x128xf32> to vector<8x128xf32>
    %12 = arith.addf %9, %11 : vector<8x128xf32>
    %c0_10 = arith.constant 0 : index
    %c0_11 = arith.constant 0 : index
    %13 = vector.load %arg6[%c0_10, %c0_11] : memref<8x128xf32, #tpu.memory_space<vmem>>, vector<8x128xf32>
    tpu.vector_store %arg6[%c0_10, %c0_11], %12 {strides = array<i32>} : memref<8x128xf32, #tpu.memory_space<vmem>>, vector<8x128xf32>,
    return
  }
  func.func @transform_0(%arg0: i32) -> (i32, i32) {
    %c0_i32 = arith.constant 0 : i32
    %c0_i32_0 = arith.constant 0 : i32
    return %arg0, %c0_i32 : i32, i32
  }
  func.func @transform_1(%arg0: i32) -> (i32, i32) {
    %c0_i32 = arith.constant 0 : i32
    %c0_i32_0 = arith.constant 0 : i32
    %c0_i32_1 = arith.constant 0 : i32
    return %c0_i32, %c0_i32_0 : i32, i32
  }
  func.func @transform_2(%arg0: i32) -> (i32, i32) {
    %c0_i32 = arith.constant 0 : i32
    %c0_i32_0 = arith.constant 0 : i32
    %c0_i32_1 = arith.constant 0 : i32
    return %c0_i32, %c0_i32_0 : i32, i32
  }
  func.func @transform_3(%arg0: i32) -> (i32, i32) {
    %c0_i32 = arith.constant 0 : i32
    %c0_i32_0 = arith.constant 0 : i32
    %c0_i32_1 = arith.constant 0 : i32
    return %c0_i32, %c0_i32_0 : i32, i32
  }
  func.func @transform_4(%arg0: i32) -> (i32, i32) {
    %c0_i32 = arith.constant 0 : i32
    %c0_i32_0 = arith.constant 0 : i32
    %c0_i32_1 = arith.constant 0 : i32
    return %c0_i32, %c0_i32_0 : i32, i32
  }
  func.func @transform_5(%arg0: i32) -> (i32, i32) {
    %c0_i32 = arith.constant 0 : i32
    %c0_i32_0 = arith.constant 0 : i32
    return %arg0, %c0_i32 : i32, i32
  }
}

</mosaic_0001>

<llo_original>
// kernel: tpu_custom_call.1
$region0: #{tpu_custom_call.1}
  #allocation0 [shape = 'u32[]', space=smem, size = 0x4, offset = 0x4, fixed_abs, tag = 'smem constant byte address 0x4 - core index']
  #allocation1 [shape = 'u32[144,128]{1,0:T(1,128)}', space=vmem, size = 0x12000, scoped, tag = 'internal scratch']
  %s0 = inlined_call_operand.hbm [shape: bf16[8,32], index: 0, kind: input, shape index: {}]
  %s1 = inlined_call_operand.hbm [shape: bf16[32,64], index: 1, kind: input, shape index: {}]
  %s2 = inlined_call_operand.vmem [shape: f32[1,64], index: 2, kind: input, shape index: {}]
  %s3 = inlined_call_operand.hbm [shape: bf16[64,128], index: 3, kind: input, shape index: {}]
  %s4 = inlined_call_operand.vmem [shape: f32[1,128], index: 4, kind: input, shape index: {}]
  %s5 = inlined_call_operand.hbm [shape: f32[8,128], index: 5, kind: output, shape index: {}]
  %s6 = sld [smem:[#allocation0]]
  $region42: #{tpu_custom_call.1} parent=0
    _
  %s8 = ssub.s32 1, %s6
  %s9 = scalar_select 0, %s8, %s6
  $region1: #{tpu_custom_call.1} parent=0
    #allocation2 [shape = 'u8[2048]{0}', space=vmem, size = 0x800, scoped, tag = 'input window, operand 0, single buffered']
    #allocation3 [shape = 's32[1]{0}', space=sflag, size = 0x4, scoped, tag = 'scoped memory for tpu_custom_call.1']
    #allocation4 [shape = 's32[1]{0}', space=sflag, size = 0x4, scoped, tag = 'scoped memory for tpu_custom_call.1']
    #allocation5 [shape = 'u8[8192]{0}', space=vmem, size = 0x2000, scoped, tag = 'input window, operand 1, single buffered']
    #allocation6 [shape = 's32[1]{0}', space=sflag, size = 0x4, scoped, tag = 'scoped memory for tpu_custom_call.1']
    #allocation7 [shape = 'u8[16384]{0}', space=vmem, size = 0x4000, scoped, tag = 'input window, operand 3, single buffered']
    #allocation8 [shape = 'u8[4096]{0}', space=vmem, size = 0x1000, scoped, tag = 'output window, operand 0, single buffered']
    %10 = vsyncpa [#allocation3], 0
    %11 = vsyncpa [#allocation6], 0
    %12 = vsyncpa [#allocation4], 0
    // Predicated region
    $region2: #{tpu_custom_call.1} parent=1 // pred_check
      _
    $region3: #{tpu_custom_call.1} parent=1 // pred_check_branch
      %14 = sbr.rel (0) target = $region5
    $region4: #{tpu_custom_call.1} parent=1 // pred_region
      %s16 = ssub.s32 64, 64
      %17 = vsyncadd [#allocation3], %s16
      %s19 = sshll.u32 [#allocation2], 4
      %s20 = int_to_ptr.vmem [resolvable:$true] %s19
      %22 = dma.hbm_to_vmem [thread:$0]  %s0, 64, %s20, [#allocation3]
    $region5: #{tpu_custom_call.1} parent=1 // pred_fallthru
      _
    // Predicated region
    $region6: #{tpu_custom_call.1} parent=1 // pred_check
      _
    $region7: #{tpu_custom_call.1} parent=1 // pred_check_branch
      %24 = sbr.rel (0) target = $region9
    $region8: #{tpu_custom_call.1} parent=1 // pred_region
      %s26 = ssub.s32 256, 256
      %27 = vsyncadd [#allocation6], %s26
      %s28 = sshll.u32 [#allocation5], 4
      %s29 = int_to_ptr.vmem [resolvable:$true] %s28
      %34 = dma.hbm_to_vmem [thread:$0]  %s1, 256, %s29, [#allocation6], 64, 64, 4
    $region9: #{tpu_custom_call.1} parent=1 // pred_fallthru
      _
    // Predicated region
    $region10: #{tpu_custom_call.1} parent=1 // pred_check
      _
    $region11: #{tpu_custom_call.1} parent=1 // pred_check_branch
      %36 = sbr.rel (0) target = $region13
    $region12: #{tpu_custom_call.1} parent=1 // pred_region
      _
    $region13: #{tpu_custom_call.1} parent=1 // pred_fallthru
      _
    // Predicated region
    $region14: #{tpu_custom_call.1} parent=1 // pred_check
      _
    $region15: #{tpu_custom_call.1} parent=1 // pred_check_branch
      %38 = sbr.rel (0) target = $region17
    $region16: #{tpu_custom_call.1} parent=1 // pred_region
      %s40 = ssub.s32 512, 512
      %41 = vsyncadd [#allocation6], %s40
      %s42 = sshll.u32 [#allocation7], 4
      %s43 = int_to_ptr.vmem [resolvable:$true] %s42
      %48 = dma.hbm_to_vmem [thread:$0]  %s3, 512, %s43, [#allocation6], 64, 64, 4
    $region17: #{tpu_custom_call.1} parent=1 // pred_fallthru
      _
    // Predicated region
    $region18: #{tpu_custom_call.1} parent=1 // pred_check
      _
    $region19: #{tpu_custom_call.1} parent=1 // pred_check_branch
      %50 = sbr.rel (0) target = $region21
    $region20: #{tpu_custom_call.1} parent=1 // pred_region
      _
    $region21: #{tpu_custom_call.1} parent=1 // pred_fallthru
      _
    // Predicated region
    $region22: #{tpu_custom_call.1} parent=1 // pred_check
      _
    $region23: #{tpu_custom_call.1} parent=1 // pred_check_branch
      %52 = sbr.rel (0) target = $region25
    $region24: #{tpu_custom_call.1} parent=1 // pred_region
      %53 = dma.done [#allocation3], 64
    $region25: #{tpu_custom_call.1} parent=1 // pred_fallthru
      _
    // Predicated region
    $region26: #{tpu_custom_call.1} parent=1 // pred_check
      _
    $region27: #{tpu_custom_call.1} parent=1 // pred_check_branch
      %55 = sbr.rel (0) target = $region29
    $region28: #{tpu_custom_call.1} parent=1 // pred_region
      %56 = dma.done [#allocation6], 256
    $region29: #{tpu_custom_call.1} parent=1 // pred_fallthru
      _
    // Predicated region
    $region30: #{tpu_custom_call.1} parent=1 // pred_check
      _
    $region31: #{tpu_custom_call.1} parent=1 // pred_check_branch
      %58 = sbr.rel (0) target = $region33
    $region32: #{tpu_custom_call.1} parent=1 // pred_region
      %59 = dma.done [#allocation6], 512
    $region33: #{tpu_custom_call.1} parent=1 // pred_fallthru
      _
    %v61 = vld [vmem:[#allocation2] sm:$0xf]
    %v62 = vld [vmem:[#allocation5] sm:$0xf]
    %v63 = vld [vmem:[#allocation5 + $0x4] sm:$0xf]
    %v64 = vld [vmem:[#allocation5 + $0x8] sm:$0xf]
    %v65 = vld [vmem:[#allocation5 + $0xc] sm:$0xf]
    %v66 = vld [vmem:[%s2] sm:$0x1]
    %v68 = vlaneseq
    %v69 = vshrl.u32 %v68, 7
    %v70 = vsub.s32 0, %v69
    %v71 = vrot.slane %v66, %v70
    %v77 = vunpack.c.l.b16 %v62
    %v78 = vunpack.c.l.b16 %v63
    %v79 = vunpack.c.l.b16 %v64
    %v80 = vunpack.c.l.b16 %v65
    %v81 = vpack.c.b16 %v78, %v77
    %v82 = vpack.c.b16 %v80, %v79
    %vm85 = vcmask 261120
    %v87 = vsel %vm85, %v61, 0
    %89 = vmatprep.subr.bf16.mxu0 0
    %90 = vmatpush1.bf16.msra.mxu0 %v81
    %91 = vmatprep.subr.bf16.mxu0 0
    %92 = vmatpush1.bf16.msra.mxu0 %v82
    %93 = vmatprep.subr.bf16.mxu0 0
    %94 = vmatpush1.bf16.msra.mxu0 0
    %95 = vmatprep.subr.bf16.mxu0 0
    %96 = vmatpush1.bf16.msra.mxu0 0
    %97 = vmatprep.subr.bf16.mxu0 0
    %98 = vmatpush1.bf16.msra.mxu0 0
    %99 = vmatprep.subr.bf16.mxu0 0
    %100 = vmatpush1.bf16.msra.mxu0 0
    %101 = vmatprep.subr.bf16.mxu0 0
    %102 = vmatpush1.bf16.msra.mxu0 0
    %103 = vmatprep.subr.bf16.mxu0 0
    %104 = vmatpush1.bf16.msra.mxu0 0
    %105 = vmatprep.subr.bf16.mxu0 0
    %106 = vmatpush1.bf16.msra.mxu0 0
    %107 = vmatprep.subr.bf16.mxu0 0
    %108 = vmatpush1.bf16.msra.mxu0 0
    %109 = vmatprep.subr.bf16.mxu0 0
    %110 = vmatpush1.bf16.msra.mxu0 0
    %111 = vmatprep.subr.bf16.mxu0 0
    %112 = vmatpush1.bf16.msra.mxu0 0
    %113 = vmatprep.subr.bf16.mxu0 0
    %114 = vmatpush1.bf16.msra.mxu0 0
    %115 = vmatprep.subr.bf16.mxu0 0
    %116 = vmatpush1.bf16.msra.mxu0 0
    %117 = vmatprep.subr.bf16.mxu0 0
    %118 = vmatpush1.bf16.msra.mxu0 0
    %119 = vmatprep.subr.bf16.mxu0 0
    %120 = vmatpush1.bf16.msra.mxu0 0
    %121 = vmatprep.mubr.bf16.mxu0 0
    %122 = vmatmul.mubr.bf16.gmra.mrb[0].mxu0 %v87
    %v123 = vpop.f32.mrb[0].mxu0
    %v124 = vadd.f32 %v71, %v123
    %v125 = vpop.f32.mrb[0].mxu0
    %v126 = vpop.f32.mrb[0].mxu0
    %v127 = vpop.f32.mrb[0].mxu0
    %128 = vdwg.mxu0
    %v129 = vtanh.pop %v124
    %v130 = vpack.c.bf16 %v129, %v129
    %v131 = vld [vmem:[#allocation7] sm:$0xf]
    %v132 = vld [vmem:[#allocation7 + $0x4] sm:$0xf]
    %v133 = vld [vmem:[#allocation7 + $0x8] sm:$0xf]
    %v134 = vld [vmem:[#allocation7 + $0xc] sm:$0xf]
    %v135 = vld [vmem:[#allocation7 + $0x10] sm:$0xf]
    %v136 = vld [vmem:[#allocation7 + $0x14] sm:$0xf]
    %v137 = vld [vmem:[#allocation7 + $0x18] sm:$0xf]
    %v138 = vld [vmem:[#allocation7 + $0x1c] sm:$0xf]
    %v139 = vld [vmem:[%s4] sm:$0x1]
    %v141 = vlaneseq
    %v142 = vshrl.u32 %v141, 7
    %v143 = vsub.s32 0, %v142
    %v144 = vrot.slane %v139, %v143
    %v154 = vunpack.c.l.b16 %v131
    %v155 = vunpack.c.l.b16 %v132
    %v156 = vunpack.c.l.b16 %v133
    %v157 = vunpack.c.l.b16 %v134
    %v158 = vunpack.c.l.b16 %v135
    %v159 = vunpack.c.l.b16 %v136
    %v160 = vunpack.c.l.b16 %v137
    %v161 = vunpack.c.l.b16 %v138
    %v162 = vpack.c.b16 %v155, %v154
    %v163 = vpack.c.b16 %v157, %v156
    %v164 = vpack.c.b16 %v159, %v158
    %v165 = vpack.c.b16 %v161, %v160
    %vm170 = vcmask 523264
    %v172 = vsel %vm170, %v130, 0
    %174 = vmatprep.subr.bf16.mxu0 0
    %175 = vmatpush1.bf16.msra.mxu0 %v162
    %176 = vmatprep.subr.bf16.mxu0 0
    %177 = vmatpush1.bf16.msra.mxu0 %v163
    %178 = vmatprep.subr.bf16.mxu0 0
    %179 = vmatpush1.bf16.msra.mxu0 %v164
    %180 = vmatprep.subr.bf16.mxu0 0
    %181 = vmatpush1.bf16.msra.mxu0 %v165
    %182 = vmatprep.subr.bf16.mxu0 0
    %183 = vmatpush1.bf16.msra.mxu0 0
    %184 = vmatprep.subr.bf16.mxu0 0
    %185 = vmatpush1.bf16.msra.mxu0 0
    %186 = vmatprep.subr.bf16.mxu0 0
    %187 = vmatpush1.bf16.msra.mxu0 0
    %188 = vmatprep.subr.bf16.mxu0 0
    %189 = vmatpush1.bf16.msra.mxu0 0
    %190 = vmatprep.subr.bf16.mxu0 0
    %191 = vmatpush1.bf16.msra.mxu0 0
    %192 = vmatprep.subr.bf16.mxu0 0
    %193 = vmatpush1.bf16.msra.mxu0 0
    %194 = vmatprep.subr.bf16.mxu0 0
    %195 = vmatpush1.bf16.msra.mxu0 0
    %196 = vmatprep.subr.bf16.mxu0 0
    %197 = vmatpush1.bf16.msra.mxu0 0
    %198 = vmatprep.subr.bf16.mxu0 0
    %199 = vmatpush1.bf16.msra.mxu0 0
    %200 = vmatprep.subr.bf16.mxu0 0
    %201 = vmatpush1.bf16.msra.mxu0 0
    %202 = vmatprep.subr.bf16.mxu0 0
    %203 = vmatpush1.bf16.msra.mxu0 0
    %204 = vmatprep.subr.bf16.mxu0 0
    %205 = vmatpush1.bf16.msra.mxu0 0
    %206 = vmatprep.mubr.bf16.mxu0 0
    %207 = vmatmul.mubr.bf16.gmra.mrb[0].mxu0 %v172
    %v208 = vpop.f32.mrb[0].mxu0
    %v209 = vadd.f32 %v144, %v208
    %v210 = vpop.f32.mrb[0].mxu0
    %v211 = vpop.f32.mrb[0].mxu0
    %v212 = vpop.f32.mrb[0].mxu0
    %213 = vdwg.mxu0
    %214 = vst [vmem:[#allocation8] sm:$0xff] %v209
    // Predicated region
    $region34: #{tpu_custom_call.1} parent=1 // pred_check
      _
    $region35: #{tpu_custom_call.1} parent=1 // pred_check_branch
      %216 = sbr.rel (0) target = $region37
    $region36: #{tpu_custom_call.1} parent=1 // pred_region
      %s218 = ssub.s32 128, 128
      %219 = vsyncadd [#allocation4], %s218
      %s221 = sshll.u32 [#allocation8], 4
      %s222 = int_to_ptr.vmem [resolvable:$true] %s221
      %224 = dma.vmem_to_hbm [thread:$0]  %s222, 128, %s5, [#allocation4]
    $region37: #{tpu_custom_call.1} parent=1 // pred_fallthru
      _
    // Predicated region
    $region38: #{tpu_custom_call.1} parent=1 // pred_check
      _
    $region39: #{tpu_custom_call.1} parent=1 // pred_check_branch
      %226 = sbr.rel (0) target = $region41
    $region40: #{tpu_custom_call.1} parent=1 // pred_region
      %227 = dma.done [#allocation4], 128
    $region41: #{tpu_custom_call.1} parent=1 // pred_fallthru
      _
    %228 = vsyncpa [#allocation3], 1
    %229 = vsyncpa [#allocation6], 1
    %230 = vsyncpa [#allocation4], 1

</llo_original>
